<compile_context>
chip_gen: v6e
topology: v6e:2x2x1
jax: 0.10.0
libtpu: 0.0.40
codegen_flags: <defaults>
</compile_context>

<pallas_src>
import functools

import jax
import jax.numpy as jnp
from jax import lax
from jax.experimental import pallas as pl
from jax.experimental.pallas import tpu as pltpu


def rnn_kernel(x_ref, rnn_ref, head_ref, out_ref, xproj_ref):
    # x_ref:    (seq_len, block_b, input_size)
    # rnn_ref:  (input_size + hidden + 1, hidden)  = [W_ih^T; W_hh^T; b_ih+b_hh]
    # head_ref: (hidden + 1, out_dim)              = [W_lin^T; b_lin]
    # out_ref:  (block_b, out_dim)
    # xproj_ref: VMEM scratch (seq_len * block_b, hidden)
    seq_len, bb, input_size = x_ref.shape
    hidden = rnn_ref.shape[1]

    w_ih_t = rnn_ref[0:input_size, :]                          # (I, H)
    w_hh_t = rnn_ref[input_size:input_size + hidden, :]        # (H, H)
    b_rnn = rnn_ref[input_size + hidden:input_size + hidden + 1, :]  # (1, H)

    # Hoisted input projection for ALL timesteps and the whole batch block:
    # one MXU matmul, biases folded in; staged in VMEM so the serial loop
    # below reads each step's rows with a plain sublane load.
    x2d = x_ref[...].reshape(seq_len * bb, input_size)
    xproj_ref[...] = (
        jnp.dot(x2d, w_ih_t, preferred_element_type=jnp.float32) + b_rnn
    )

    # Recurrence: hidden carry (block_b, hidden) lives in vregs; static trip
    # count -> fully unrolled for LLO visibility.
    h = jnp.ones((bb, hidden), jnp.float32)   # torch.ones init, one per sequence
    for t in range(seq_len):
        h = jnp.tanh(
            xproj_ref[pl.ds(t * bb, bb), :]
            + jnp.dot(h, w_hh_t, preferred_element_type=jnp.float32)
        )

    # Final linear head + row-wise softmax (exact divide -- see header note).
    w_l_t = head_ref[0:hidden, :]                              # (H, D)
    b_l = head_ref[hidden:hidden + 1, :]                       # (1, D)
    o = jnp.dot(h, w_l_t, preferred_element_type=jnp.float32) + b_l
    m = jnp.max(o, axis=-1, keepdims=True)
    e = jnp.exp(o - m)
    out_ref[...] = e / jnp.sum(e, axis=-1, keepdims=True)


def pack_params(w_ih, w_hh, b_ih, b_hh, w_lin, b_lin):
    """One-time weight preparation (NOT on the per-call hot path)."""
    hidden = w_ih.shape[0]
    out_dim = w_lin.shape[0]
    rnn_slab = jnp.concatenate(
        [
            jnp.asarray(w_ih, jnp.float32).T,                  # (I, H)
            jnp.asarray(w_hh, jnp.float32).T,                  # (H, H)
            (jnp.asarray(b_ih, jnp.float32)
             + jnp.asarray(b_hh, jnp.float32)).reshape(1, hidden),
        ],
        axis=0,
    )                                                          # (I+H+1, H)
    head_slab = jnp.concatenate(
        [
            jnp.asarray(w_lin, jnp.float32).T,                 # (H, D)
            jnp.asarray(b_lin, jnp.float32).reshape(1, out_dim),
        ],
        axis=0,
    )                                                          # (H+1, D)
    return rnn_slab, head_slab


def ptrnn_forward(x_tbi, rnn_slab, head_slab, *, block_b=8):
    """x_tbi: (seq_len, batch, input_size) f32 (nn.RNN time-major layout).

    Returns softmax probabilities of shape (batch, out_dim); each batch row is
    exactly the original single-sequence PTRNN.forward applied to that sequence.
    """
    seq_len, batch, input_size = x_tbi.shape
    hidden = rnn_slab.shape[1]
    out_dim = head_slab.shape[1]
    assert batch % block_b == 0, "batch must be a multiple of block_b"

    grid = (batch // block_b,)
    return pl.pallas_call(
        rnn_kernel,
        out_shape=jax.ShapeDtypeStruct((batch, out_dim), jnp.float32),
        grid_spec=pltpu.PrefetchScalarGridSpec(
            num_scalar_prefetch=0,
            grid=grid,
            in_specs=[
                pl.BlockSpec((seq_len, block_b, input_size), lambda b: (0, b, 0)),
                pl.BlockSpec(rnn_slab.shape, lambda b: (0, 0)),
                pl.BlockSpec(head_slab.shape, lambda b: (0, 0)),
            ],
            out_specs=pl.BlockSpec((block_b, out_dim), lambda b: (b, 0)),
            scratch_shapes=[
                pltpu.VMEM((seq_len * block_b, hidden), jnp.float32),
            ],
        ),
        compiler_params=pltpu.CompilerParams(
            dimension_semantics=("parallel",)),
    )(x_tbi, rnn_slab, head_slab)


def reference_forward(x_tbi, w_ih, w_hh, b_ih, b_hh, w_lin, b_lin):
    """Pure-JAX reference, batched along axis 1 (same per-sequence math)."""
    seq_len = x_tbi.shape[0]
    batch = x_tbi.shape[1]
    hidden = w_ih.shape[0]
    hp = lax.Precision.HIGHEST
    h = jnp.ones((batch, hidden), jnp.float32)
    for t in range(seq_len):
        h = jnp.tanh(
            jnp.dot(x_tbi[t], w_ih.T, precision=hp) + b_ih
            + jnp.dot(h, w_hh.T, precision=hp) + b_hh
        )
    o = jnp.dot(h, w_lin.T, precision=hp) + b_lin
    return jax.nn.softmax(o, axis=-1)


if __name__ == "__main__":
    # Small, module-consistent shapes: bigram-count (input_size)=32,
    # hidden_size=32, out_dim (#languages)=8, sequence length=8,
    # batch of 16 independent sequences split into 2 blocks of 8.
    seq_len, input_size, hidden, out_dim = 8, 32, 32, 8
    batch, block_b = 16, 8

    key = jax.random.PRNGKey(0)
    ks = jax.random.split(key, 7)
    s = 1.0 / jnp.sqrt(hidden)
    x = jax.random.normal(ks[0], (seq_len, batch, input_size), jnp.float32)
    w_ih = jax.random.uniform(ks[1], (hidden, input_size), jnp.float32, -s, s)
    w_hh = jax.random.uniform(ks[2], (hidden, hidden), jnp.float32, -s, s)
    b_ih = jax.random.uniform(ks[3], (hidden,), jnp.float32, -s, s)
    b_hh = jax.random.uniform(ks[4], (hidden,), jnp.float32, -s, s)
    w_lin = jax.random.uniform(ks[5], (out_dim, hidden), jnp.float32, -s, s)
    b_lin = jax.random.uniform(ks[6], (out_dim,), jnp.float32, -s, s)

    # One-time parameter packing (outside the hot path).
    rnn_slab, head_slab = pack_params(w_ih, w_hh, b_ih, b_hh, w_lin, b_lin)
    jax.block_until_ready(rnn_slab)
    jax.block_until_ready(head_slab)

    # Hot path: exactly one pallas_call, no wrapper glue ops.
    fwd = jax.jit(functools.partial(ptrnn_forward, block_b=block_b))
    yhat = fwd(x, rnn_slab, head_slab)
    yhat = jax.block_until_ready(yhat)

    ref = reference_forward(x, w_ih, w_hh, b_ih, b_hh, w_lin, b_lin)
    assert yhat.shape == (batch, out_dim)
    assert bool(jnp.allclose(jnp.sum(yhat, axis=-1), 1.0, atol=1e-5))
    assert bool(jnp.allclose(yhat, ref, atol=1e-5, rtol=1e-4))

    print("KERNEL_OK")
</pallas_src>

<mosaic_0001>
module attributes {stable_mosaic.version = 11 : i64} {
  func.func @rnn_kernel(%arg0: i32, %arg1: memref<8x8x32xf32, #tpu.memory_space<vmem>>, %arg2: memref<65x32xf32, #tpu.memory_space<vmem>>, %arg3: memref<33x8xf32, #tpu.memory_space<vmem>>, %arg4: memref<8x8xf32, #tpu.memory_space<vmem>>, %arg5: memref<64x32xf32, #tpu.memory_space<vmem>>) attributes {dimension_semantics = [#tpu.dimension_semantics<parallel>], iteration_bounds = array<i64: 2>, scalar_prefetch = 0 : i64, scratch_operands = 1 : i64, tpu.core_type = #tpu.core_type<tc>, window_params = [{transform_indices = @transform_0, window_bounds = array<i64: 8, 8, 32>}, {pipeline_mode = #tpu.pipeline_mode<synchronous>, transform_indices = @transform_1, window_bounds = array<i64: 65, 32>}, {pipeline_mode = #tpu.pipeline_mode<synchronous>, transform_indices = @transform_2, window_bounds = array<i64: 33, 8>}, {transform_indices = @transform_3, window_bounds = array<i64: 8, 8>}]} {
    %c0 = arith.constant 0 : index
    %c0_0 = arith.constant 0 : index
    %0 = vector.load %arg2[%c0, %c0_0] : memref<65x32xf32, #tpu.memory_space<vmem>>, vector<32x32xf32>
    %c32 = arith.constant 32 : index
    %c0_1 = arith.constant 0 : index
    %1 = vector.load %arg2[%c32, %c0_1] : memref<65x32xf32, #tpu.memory_space<vmem>>, vector<32x32xf32>
    %c64 = arith.constant 64 : index
    %c0_2 = arith.constant 0 : index
    %2 = vector.load %arg2[%c64, %c0_2] : memref<65x32xf32, #tpu.memory_space<vmem>>, vector<1x32xf32>
    %c0_3 = arith.constant 0 : index
    %c0_4 = arith.constant 0 : index
    %c0_5 = arith.constant 0 : index
    %3 = vector.load %arg1[%c0_3, %c0_4, %c0_5] : memref<8x8x32xf32, #tpu.memory_space<vmem>>, vector<8x8x32xf32>
    %4 = vector.shape_cast %3 : vector<8x8x32xf32> to vector<64x32xf32>
    %cst = arith.constant dense<0.000000e+00> : vector<64x32xf32>
    %5 = tpu.matmul %4, %0, %cst {dimension_numbers = #tpu.dot_dimension_numbers<[1], [0], [0], [1], [0, 0, 1, 1], [], []>} : vector<64x32xf32>, vector<32x32xf32>, vector<64x32xf32> -> vector<64x32xf32>
    %6 = vector.broadcast %2 : vector<1x32xf32> to vector<64x32xf32>
    %7 = arith.addf %5, %6 : vector<64x32xf32>
    %c0_6 = arith.constant 0 : index
    %c0_7 = arith.constant 0 : index
    %8 = vector.load %arg5[%c0_6, %c0_7] : memref<64x32xf32, #tpu.memory_space<vmem>>, vector<64x32xf32>
    tpu.vector_store %arg5[%c0_6, %c0_7], %7 {strides = array<i32>} : memref<64x32xf32, #tpu.memory_space<vmem>>, vector<64x32xf32>,
    %cst_8 = arith.constant 1.000000e+00 : f32
    %9 = vector.broadcast %cst_8 : f32 to vector<8x32xf32>
    %c0_9 = arith.constant 0 : index
    %c0_10 = arith.constant 0 : index
    %10 = vector.load %arg5[%c0_9, %c0_10] : memref<64x32xf32, #tpu.memory_space<vmem>>, vector<8x32xf32>
    %cst_11 = arith.constant dense<0.000000e+00> : vector<8x32xf32>
    %11 = tpu.matmul %9, %1, %cst_11 {dimension_numbers = #tpu.dot_dimension_numbers<[1], [0], [0], [1], [0, 0, 1, 1], [], []>} : vector<8x32xf32>, vector<32x32xf32>, vector<8x32xf32> -> vector<8x32xf32>
    %12 = arith.addf %10, %11 : vector<8x32xf32>
    %13 = math.tanh %12 : vector<8x32xf32>
    %c8 = arith.constant 8 : index
    %c0_12 = arith.constant 0 : index
    %14 = vector.load %arg5[%c8, %c0_12] : memref<64x32xf32, #tpu.memory_space<vmem>>, vector<8x32xf32>
    %cst_13 = arith.constant dense<0.000000e+00> : vector<8x32xf32>
    %15 = tpu.matmul %13, %1, %cst_13 {dimension_numbers = #tpu.dot_dimension_numbers<[1], [0], [0], [1], [0, 0, 1, 1], [], []>} : vector<8x32xf32>, vector<32x32xf32>, vector<8x32xf32> -> vector<8x32xf32>
    %16 = arith.addf %14, %15 : vector<8x32xf32>
    %17 = math.tanh %16 : vector<8x32xf32>
    %c16 = arith.constant 16 : index
    %c0_14 = arith.constant 0 : index
    %18 = vector.load %arg5[%c16, %c0_14] : memref<64x32xf32, #tpu.memory_space<vmem>>, vector<8x32xf32>
    %cst_15 = arith.constant dense<0.000000e+00> : vector<8x32xf32>
    %19 = tpu.matmul %17, %1, %cst_15 {dimension_numbers = #tpu.dot_dimension_numbers<[1], [0], [0], [1], [0, 0, 1, 1], [], []>} : vector<8x32xf32>, vector<32x32xf32>, vector<8x32xf32> -> vector<8x32xf32>
    %20 = arith.addf %18, %19 : vector<8x32xf32>
    %21 = math.tanh %20 : vector<8x32xf32>
    %c24 = arith.constant 24 : index
    %c0_16 = arith.constant 0 : index
    %22 = vector.load %arg5[%c24, %c0_16] : memref<64x32xf32, #tpu.memory_space<vmem>>, vector<8x32xf32>
    %cst_17 = arith.constant dense<0.000000e+00> : vector<8x32xf32>
    %23 = tpu.matmul %21, %1, %cst_17 {dimension_numbers = #tpu.dot_dimension_numbers<[1], [0], [0], [1], [0, 0, 1, 1], [], []>} : vector<8x32xf32>, vector<32x32xf32>, vector<8x32xf32> -> vector<8x32xf32>
    %24 = arith.addf %22, %23 : vector<8x32xf32>
    %25 = math.tanh %24 : vector<8x32xf32>
    %c32_18 = arith.constant 32 : index
    %c0_19 = arith.constant 0 : index
    %26 = vector.load %arg5[%c32_18, %c0_19] : memref<64x32xf32, #tpu.memory_space<vmem>>, vector<8x32xf32>
    %cst_20 = arith.constant dense<0.000000e+00> : vector<8x32xf32>
    %27 = tpu.matmul %25, %1, %cst_20 {dimension_numbers = #tpu.dot_dimension_numbers<[1], [0], [0], [1], [0, 0, 1, 1], [], []>} : vector<8x32xf32>, vector<32x32xf32>, vector<8x32xf32> -> vector<8x32xf32>
    %28 = arith.addf %26, %27 : vector<8x32xf32>
    %29 = math.tanh %28 : vector<8x32xf32>
    %c40 = arith.constant 40 : index
    %c0_21 = arith.constant 0 : index
    %30 = vector.load %arg5[%c40, %c0_21] : memref<64x32xf32, #tpu.memory_space<vmem>>, vector<8x32xf32>
    %cst_22 = arith.constant dense<0.000000e+00> : vector<8x32xf32>
    %31 = tpu.matmul %29, %1, %cst_22 {dimension_numbers = #tpu.dot_dimension_numbers<[1], [0], [0], [1], [0, 0, 1, 1], [], []>} : vector<8x32xf32>, vector<32x32xf32>, vector<8x32xf32> -> vector<8x32xf32>
    %32 = arith.addf %30, %31 : vector<8x32xf32>
    %33 = math.tanh %32 : vector<8x32xf32>
    %c48 = arith.constant 48 : index
    %c0_23 = arith.constant 0 : index
    %34 = vector.load %arg5[%c48, %c0_23] : memref<64x32xf32, #tpu.memory_space<vmem>>, vector<8x32xf32>
    %cst_24 = arith.constant dense<0.000000e+00> : vector<8x32xf32>
    %35 = tpu.matmul %33, %1, %cst_24 {dimension_numbers = #tpu.dot_dimension_numbers<[1], [0], [0], [1], [0, 0, 1, 1], [], []>} : vector<8x32xf32>, vector<32x32xf32>, vector<8x32xf32> -> vector<8x32xf32>
    %36 = arith.addf %34, %35 : vector<8x32xf32>
    %37 = math.tanh %36 : vector<8x32xf32>
    %c56 = arith.constant 56 : index
    %c0_25 = arith.constant 0 : index
    %38 = vector.load %arg5[%c56, %c0_25] : memref<64x32xf32, #tpu.memory_space<vmem>>, vector<8x32xf32>
    %cst_26 = arith.constant dense<0.000000e+00> : vector<8x32xf32>
    %39 = tpu.matmul %37, %1, %cst_26 {dimension_numbers = #tpu.dot_dimension_numbers<[1], [0], [0], [1], [0, 0, 1, 1], [], []>} : vector<8x32xf32>, vector<32x32xf32>, vector<8x32xf32> -> vector<8x32xf32>
    %40 = arith.addf %38, %39 : vector<8x32xf32>
    %41 = math.tanh %40 : vector<8x32xf32>
    %c0_27 = arith.constant 0 : index
    %c0_28 = arith.constant 0 : index
    %42 = vector.load %arg3[%c0_27, %c0_28] : memref<33x8xf32, #tpu.memory_space<vmem>>, vector<32x8xf32>
    %c32_29 = arith.constant 32 : index
    %c0_30 = arith.constant 0 : index
    %43 = vector.load %arg3[%c32_29, %c0_30] : memref<33x8xf32, #tpu.memory_space<vmem>>, vector<1x8xf32>
    %cst_31 = arith.constant dense<0.000000e+00> : vector<8x8xf32>
    %44 = tpu.matmul %41, %42, %cst_31 {dimension_numbers = #tpu.dot_dimension_numbers<[1], [0], [0], [1], [0, 0, 1, 1], [], []>} : vector<8x32xf32>, vector<32x8xf32>, vector<8x8xf32> -> vector<8x8xf32>
    %45 = vector.broadcast %43 : vector<1x8xf32> to vector<8x8xf32>
    %46 = arith.addf %44, %45 : vector<8x8xf32>
    %cst_32 = arith.constant dense<0xFF800000> : vector<8xf32>
    %47 = vector.multi_reduction <maximumf>, %46, %cst_32 [1] : vector<8x8xf32> to vector<8xf32>
    %48 = vector.shape_cast %47 : vector<8xf32> to vector<8x1xf32>
    %49 = vector.broadcast %48 : vector<8x1xf32> to vector<8x8xf32>
    %50 = arith.subf %46, %49 : vector<8x8xf32>
    %51 = math.exp %50 : vector<8x8xf32>
    %cst_33 = arith.constant dense<0.000000e+00> : vector<8xf32>
    %52 = vector.multi_reduction <add>, %51, %cst_33 [1] : vector<8x8xf32> to vector<8xf32>
    %53 = vector.shape_cast %52 : vector<8xf32> to vector<8x1xf32>
    %54 = vector.broadcast %53 : vector<8x1xf32> to vector<8x8xf32>
    %55 = arith.divf %51, %54 : vector<8x8xf32>
    %c0_34 = arith.constant 0 : index
    %c0_35 = arith.constant 0 : index
    %56 = vector.load %arg4[%c0_34, %c0_35] : memref<8x8xf32, #tpu.memory_space<vmem>>, vector<8x8xf32>
    tpu.vector_store %arg4[%c0_34, %c0_35], %55 {strides = array<i32>} : memref<8x8xf32, #tpu.memory_space<vmem>>, vector<8x8xf32>,
    return
  }
  func.func @transform_0(%arg0: i32) -> (i32, i32, i32) {
    %c0_i32 = arith.constant 0 : i32
    %c0_i32_0 = arith.constant 0 : i32
    %c0_i32_1 = arith.constant 0 : i32
    return %c0_i32, %arg0, %c0_i32_0 : i32, i32, i32
  }
  func.func @transform_1(%arg0: i32) -> (i32, i32) {
    %c0_i32 = arith.constant 0 : i32
    %c0_i32_0 = arith.constant 0 : i32
    %c0_i32_1 = arith.constant 0 : i32
    return %c0_i32, %c0_i32_0 : i32, i32
  }
  func.func @transform_2(%arg0: i32) -> (i32, i32) {
    %c0_i32 = arith.constant 0 : i32
    %c0_i32_0 = arith.constant 0 : i32
    %c0_i32_1 = arith.constant 0 : i32
    return %c0_i32, %c0_i32_0 : i32, i32
  }
  func.func @transform_3(%arg0: i32) -> (i32, i32) {
    %c0_i32 = arith.constant 0 : i32
    %c0_i32_0 = arith.constant 0 : i32
    return %arg0, %c0_i32 : i32, i32
  }
}

</mosaic_0001>

<llo_original>
// kernel: ptrnn_forward.1
$region0: #{ptrnn_forward.1}
  #allocation0 [shape = 'u32[]', space=smem, size = 0x4, offset = 0x4, fixed_abs, tag = 'smem constant byte address 0x4 - core index']
  #allocation1 [shape = 'u32[144,128]{1,0:T(1,128)}', space=vmem, size = 0x12000, scoped, tag = 'internal scratch']
  #allocation2 [shape = 'f32[64,32]{1,0:T(8,128)}', space=vmem, size = 0x8000, scoped, tag = 'scratch operand']
  %s0 = inlined_call_operand.vmem [shape: f32[8,16,32], index: 0, kind: input, shape index: {}]
  %s1 = inlined_call_operand.vmem [shape: f32[65,32], index: 1, kind: input, shape index: {}]
  %s2 = inlined_call_operand.vmem [shape: f32[33,8], index: 2, kind: input, shape index: {}]
  %s3 = inlined_call_operand.vmem [shape: f32[16,8], index: 3, kind: output, shape index: {}]
  %s4 = sld [smem:[#allocation0]]
  $region83: #{ptrnn_forward.1} parent=0
    _
  %s6 = ssub.s32 1, %s4
  %s7 = scalar_select 0, %s6, %s4
  $region1: #{ptrnn_forward.1} parent=0
    #allocation3 [shape = 'u8[65536]{0}', space=vmem, size = 0x10000, scoped, tag = 'input window, operand 0']
    loop: start=0, step=1, limit=4
    $region2: #{ptrnn_forward.1} parent=1 // loop_pre_header
      _
    $region3: #{ptrnn_forward.1} parent=1 // loop_header
      %s9 = sphi 0, %s13
      %p10 = scmp.ge.s32.totalorder %s9, 4
      %s19 = sphi 0, %s21
      %s22 = sphi 0, %s19
      %s23 = sphi 0, %s22
      %s39 = sphi 0, %s23
      %s43 = sphi 0, %s43
      %s45 = sphi 0, %s43
      %s46 = sphi 0, %s45
      %s60 = sphi 0, %s46
      %s64 = sphi 0, %s64
      %s66 = sphi 0, %s64
      %s67 = sphi 0, %s66
      %s81 = sphi 0, %s67
      %s87 = sphi 0, %s89
      %s90 = sphi 0, %s87
      %s91 = sphi 0, %s90
      %s107 = sphi 0, %s91
    $region4: #{ptrnn_forward.1} parent=1 // loop_header_branch
      %12 = sbr.rel (%p10) target = $region8
    $region5: #{ptrnn_forward.1} parent=1 // loop_body
      %s14 = ssub.s32 %s9, 1
      %s15 = ssub.s32 %s9, 2
      %s16 = sadd.s32 %s9, 1
      %s17 = ssub.s32 %s9, %s16
      %p18 = scmp.eq.s32.totalorder %s17, 0
      %s20 = sadd.s32 %s19, 1
      %s21 = scalar_select %p18, %s19, %s20
      %p24 = pneg %p18
      %p25 = scmp.eq.s32.totalorder %s9, 1
      %p26 = por %p24, %p25
      %p27 = scmp.ne.s32.totalorder %s19, %s22
      %p28 = scmp.eq.s32.totalorder %s9, 0
      %p29 = por %p27, %p28
      %p30 = scmp.ne.s32.totalorder %s19, %s22
      %p31 = scmp.eq.s32.totalorder %s14, 1
      %p32 = por %p30, %p31
      %p33 = scmp.ne.s32.totalorder %s22, %s23
      %p34 = scmp.eq.s32.totalorder %s14, 0
      %p35 = por %p33, %p34
      %p36 = scmp.ne.s32.totalorder %s22, %s23
      %p37 = scmp.eq.s32.totalorder %s15, 1
      %p38 = por %p36, %p37
      %p40 = scmp.ne.s32.totalorder %s23, %s39
      %p41 = scmp.eq.s32.totalorder %s15, 0
      %p42 = por %p40, %p41
      %s44 = sadd.s32 %s43, 1
      %p47 = scmp.eq.s32.totalorder %s9, 1
      %p48 = scmp.ne.s32.totalorder %s43, %s45
      %p49 = scmp.eq.s32.totalorder %s9, 0
      %p50 = por %p48, %p49
      %p51 = scmp.ne.s32.totalorder %s43, %s45
      %p52 = scmp.eq.s32.totalorder %s14, 1
      %p53 = por %p51, %p52
      %p54 = scmp.ne.s32.totalorder %s45, %s46
      %p55 = scmp.eq.s32.totalorder %s14, 0
      %p56 = por %p54, %p55
      %p57 = scmp.ne.s32.totalorder %s45, %s46
      %p58 = scmp.eq.s32.totalorder %s15, 1
      %p59 = por %p57, %p58
      %p61 = scmp.ne.s32.totalorder %s46, %s60
      %p62 = scmp.eq.s32.totalorder %s15, 0
      %p63 = por %p61, %p62
      %s65 = sadd.s32 %s64, 1
      %p68 = scmp.eq.s32.totalorder %s9, 1
      %p69 = scmp.ne.s32.totalorder %s64, %s66
      %p70 = scmp.eq.s32.totalorder %s9, 0
      %p71 = por %p69, %p70
      %p72 = scmp.ne.s32.totalorder %s64, %s66
      %p73 = scmp.eq.s32.totalorder %s14, 1
      %p74 = por %p72, %p73
      %p75 = scmp.ne.s32.totalorder %s66, %s67
      %p76 = scmp.eq.s32.totalorder %s14, 0
      %p77 = por %p75, %p76
      %p78 = scmp.ne.s32.totalorder %s66, %s67
      %p79 = scmp.eq.s32.totalorder %s15, 1
      %p80 = por %p78, %p79
      %p82 = scmp.ne.s32.totalorder %s67, %s81
      %p83 = scmp.eq.s32.totalorder %s15, 0
      %p84 = por %p82, %p83
      %s85 = ssub.s32 %s9, %s16
      %p86 = scmp.eq.s32.totalorder %s85, 0
      %s88 = sadd.s32 %s87, 1
      %s89 = scalar_select %p86, %s87, %s88
      %p92 = pneg %p86
      %p93 = scmp.eq.s32.totalorder %s9, 1
      %p94 = por %p92, %p93
      %p95 = scmp.ne.s32.totalorder %s87, %s90
      %p96 = scmp.eq.s32.totalorder %s9, 0
      %p97 = por %p95, %p96
      %p98 = scmp.ne.s32.totalorder %s87, %s90
      %p99 = scmp.eq.s32.totalorder %s14, 1
      %p100 = por %p98, %p99
      %p101 = scmp.ne.s32.totalorder %s90, %s91
      %p102 = scmp.eq.s32.totalorder %s14, 0
      %p103 = por %p101, %p102
      %p104 = scmp.ne.s32.totalorder %s90, %s91
      %p105 = scmp.eq.s32.totalorder %s15, 1
      %p106 = por %p104, %p105
      %p108 = scmp.ne.s32.totalorder %s91, %s107
      %p109 = scmp.eq.s32.totalorder %s15, 0
      %p110 = por %p108, %p109
      %p111 = scmp.le.s32.totalorder 1, %s9
      %p112 = scmp.lt.s32.totalorder %s9, 3
      %p113 = pnand %p111, %p112
      %p114 = pneg %p113
      // Predicated region
      $region9: #{ptrnn_forward.1} parent=5 // pred_check
        _
      $region10: #{ptrnn_forward.1} parent=5 // pred_check_branch
        %116 = sbr.rel (%p113) target = $region12
      $region11: #{ptrnn_forward.1} parent=5 // pred_region
        %s117 = ssub.s32 %s9, 1
        // Predicated region
        $region13: #{ptrnn_forward.1} parent=11 // pred_check
          %p118 = pneg %p56
        $region14: #{ptrnn_forward.1} parent=11 // pred_check_branch
          %120 = sbr.rel (%p118) target = $region16
        $region15: #{ptrnn_forward.1} parent=11 // pred_region
          _
        $region16: #{ptrnn_forward.1} parent=11 // pred_fallthru
          _
        // Predicated region
        $region17: #{ptrnn_forward.1} parent=11 // pred_check
          %p121 = pneg %p77
        $region18: #{ptrnn_forward.1} parent=11 // pred_check_branch
          %123 = sbr.rel (%p121) target = $region20
        $region19: #{ptrnn_forward.1} parent=11 // pred_region
          _
        $region20: #{ptrnn_forward.1} parent=11 // pred_fallthru
          _
      $region12: #{ptrnn_forward.1} parent=5 // pred_fallthru
        _
      %p124 = scmp.lt.s32.totalorder %s9, 2
      // Predicated region
      $region21: #{ptrnn_forward.1} parent=5 // pred_check
        %p125 = pneg %p124
      $region22: #{ptrnn_forward.1} parent=5 // pred_check_branch
        %127 = sbr.rel (%p125) target = $region24
      $region23: #{ptrnn_forward.1} parent=5 // pred_region
        // Predicated region
        $region25: #{ptrnn_forward.1} parent=23 // pred_check
          %p128 = pneg %p29
        $region26: #{ptrnn_forward.1} parent=23 // pred_check_branch
          %130 = sbr.rel (%p128) target = $region28
        $region27: #{ptrnn_forward.1} parent=23 // pred_region
          %s131 = sand.u32 %s19, 1
          %s132 = sand.u32 %s19, 1
          %s133 = smul.addr %s132, 64
          %s134 = scalar_lea.vmem [#allocation3], %s133
          %s135 = smul.addr %s9, 8
          %s136 = scalar_lea.vmem %s0, %s135
          // Predicated region
          $region29: #{ptrnn_forward.1} parent=27 // pred_check
            _
          $region30: #{ptrnn_forward.1} parent=27 // pred_check_branch
            %138 = sbr.rel (0) target = $region32
          $region31: #{ptrnn_forward.1} parent=27 // pred_region
            // Predicated region
            $region33: #{ptrnn_forward.1} parent=31 // pred_check
              _
            $region34: #{ptrnn_forward.1} parent=31 // pred_check_branch
              %140 = sbr.rel (0) target = $region36
            $region35: #{ptrnn_forward.1} parent=31 // pred_region
              // Predicated region
              $region48: #{ptrnn_forward.1} parent=35 // pred_check
                _
              $region49: #{ptrnn_forward.1} parent=35 // pred_check_branch
                %170 = sbr.rel (0) target = $region51
              $region50: #{ptrnn_forward.1} parent=35 // pred_region
                loop: start=0, step=1, limit=1
                $region52: #{ptrnn_forward.1} parent=50 // loop_pre_header
                  _
                $region53: #{ptrnn_forward.1} parent=50 // loop_header
                  %s172 = sphi 0, %s176
                  %p173 = scmp.ge.s32.totalorder %s172, 1
                  %s177 = sphi %s136, %s136
                  %s178 = sphi %s134, %s134
                $region54: #{ptrnn_forward.1} parent=50 // loop_header_branch
                  %175 = sbr.rel (%p173) target = $region58
                $region55: #{ptrnn_forward.1} parent=50 // loop_body
                  %v179 = vld [vmem:[%s177] sm:$0xff]
                  %180 = vst [vmem:[%s178] sm:$0xff] %v179
                  %v181 = vld [vmem:[%s177 + $0x10] sm:$0xff]
                  %182 = vst [vmem:[%s178 + $0x8] sm:$0xff] %v181
                  %v183 = vld [vmem:[%s177 + $0x20] sm:$0xff]
                  %184 = vst [vmem:[%s178 + $0x10] sm:$0xff] %v183
                  %v185 = vld [vmem:[%s177 + $0x30] sm:$0xff]
                  %186 = vst [vmem:[%s178 + $0x18] sm:$0xff] %v185
                  %v187 = vld [vmem:[%s177 + $0x40] sm:$0xff]
                  %188 = vst [vmem:[%s178 + $0x20] sm:$0xff] %v187
                  %v189 = vld [vmem:[%s177 + $0x50] sm:$0xff]
                  %190 = vst [vmem:[%s178 + $0x28] sm:$0xff] %v189
                  %v191 = vld [vmem:[%s177 + $0x60] sm:$0xff]
                  %192 = vst [vmem:[%s178 + $0x30] sm:$0xff] %v191
                  %v193 = vld [vmem:[%s177 + $0x70] sm:$0xff]
                  %194 = vst [vmem:[%s178 + $0x38] sm:$0xff] %v193
                $region56: #{ptrnn_forward.1} parent=50 // loop_footer
                  %s176 = sadd.s32 1, %s172
                $region57: #{ptrnn_forward.1} parent=50 // loop_footer_branch
                  %171 = sbr.rel target = $region53
                $region58: #{ptrnn_forward.1} parent=50 // loop_exit
                  _
              $region51: #{ptrnn_forward.1} parent=35 // pred_fallthru
                _
              // Predicated region
              $region59: #{ptrnn_forward.1} parent=35 // pred_check
                _
              $region60: #{ptrnn_forward.1} parent=35 // pred_check_branch
                %196 = sbr.rel target = $region62
              $region61: #{ptrnn_forward.1} parent=35 // pred_region
                _
              $region62: #{ptrnn_forward.1} parent=35 // pred_fallthru
                _
            $region36: #{ptrnn_forward.1} parent=31 // pred_fallthru
              _
            // Predicated region
            $region37: #{ptrnn_forward.1} parent=31 // pred_check
              _
            $region38: #{ptrnn_forward.1} parent=31 // pred_check_branch
              %142 = sbr.rel target = $region40
            $region39: #{ptrnn_forward.1} parent=31 // pred_region
              %s144 = ssub.s32 256, 1
              loop: start=0, step=1, limit=1
              $region41: #{ptrnn_forward.1} parent=39 // loop_pre_header
                _
              $region42: #{ptrnn_forward.1} parent=39 // loop_header
                %s146 = sphi 0, %s150
                %p147 = scmp.ge.s32.totalorder %s146, 1
                %s151 = sphi %s136, %s136
                %s152 = sphi %s134, %s134
              $region43: #{ptrnn_forward.1} parent=39 // loop_header_branch
                %149 = sbr.rel (%p147) target = $region47
              $region44: #{ptrnn_forward.1} parent=39 // loop_body
                %v153 = vld [vmem:[%s151] sm:%s144]
                %154 = vst [vmem:[%s152] sm:%s144] %v153
                %v155 = vld [vmem:[%s151 + $0x10] sm:%s144]
                %156 = vst [vmem:[%s152 + $0x8] sm:%s144] %v155
                %v157 = vld [vmem:[%s151 + $0x20] sm:%s144]
                %158 = vst [vmem:[%s152 + $0x10] sm:%s144] %v157
                %v159 = vld [vmem:[%s151 + $0x30] sm:%s144]
                %160 = vst [vmem:[%s152 + $0x18] sm:%s144] %v159
                %v161 = vld [vmem:[%s151 + $0x40] sm:%s144]
                %162 = vst [vmem:[%s152 + $0x20] sm:%s144] %v161
                %v163 = vld [vmem:[%s151 + $0x50] sm:%s144]
                %164 = vst [vmem:[%s152 + $0x28] sm:%s144] %v163
                %v165 = vld [vmem:[%s151 + $0x60] sm:%s144]
                %166 = vst [vmem:[%s152 + $0x30] sm:%s144] %v165
                %v167 = vld [vmem:[%s151 + $0x70] sm:%s144]
                %168 = vst [vmem:[%s152 + $0x38] sm:%s144] %v167
              $region45: #{ptrnn_forward.1} parent=39 // loop_footer
                %s150 = sadd.s32 1, %s146
              $region46: #{ptrnn_forward.1} parent=39 // loop_footer_branch
                %145 = sbr.rel target = $region42
              $region47: #{ptrnn_forward.1} parent=39 // loop_exit
                _
            $region40: #{ptrnn_forward.1} parent=31 // pred_fallthru
              _
          $region32: #{ptrnn_forward.1} parent=27 // pred_fallthru
            _
          %197 = vnop
        $region28: #{ptrnn_forward.1} parent=23 // pred_fallthru
          _
      $region24: #{ptrnn_forward.1} parent=5 // pred_fallthru
        _
      %p198 = scmp.le.s32.totalorder 1, %s9
      %p199 = scmp.lt.s32.totalorder %s9, 3
      %p200 = pnand %p198, %p199
      %p201 = pneg %p200
      // Predicated region
      $region63: #{ptrnn_forward.1} parent=5 // pred_check
        _
      $region64: #{ptrnn_forward.1} parent=5 // pred_check_branch
        %203 = sbr.rel (%p200) target = $region66
      $region65: #{ptrnn_forward.1} parent=5 // pred_region
        %s204 = ssub.s32 %s9, 1
        %s205 = sand.u32 %s22, 1
        %s206 = sand.u32 %s22, 1
        %s207 = smul.addr %s206, 64
        %s208 = scalar_lea.vmem [#allocation3], %s207
        // Predicated region
        $region67: #{ptrnn_forward.1} parent=65 // pred_check
          %p209 = pneg %p35
        $region68: #{ptrnn_forward.1} parent=65 // pred_check_branch
          %211 = sbr.rel (%p209) target = $region70
        $region69: #{ptrnn_forward.1} parent=65 // pred_region
          _
        $region70: #{ptrnn_forward.1} parent=65 // pred_fallthru
          _
        %s212 = sand.u32 %s22, 1
        %s213 = sand.u32 %s22, 1
        %s214 = smul.addr %s213, 64
        %s215 = scalar_lea.vmem [#allocation3], %s214
        %p216 = pneg %p35
        %p217 = pneg %p32
        %p218 = pneg %p56
        %p219 = pneg %p53
        %p220 = pneg %p77
        %p221 = pneg %p74
        %p222 = pneg %p103
        %p223 = pneg %p100
        %p224 = scmp.lt.s32.totalorder %s14, 1
        %s225 = scalar_select %p224, %s14, 1
        %s226 = smul.addr %s225, 8
        %s227 = scalar_lea.vmem %s3, %s226
        %p228 = scmp.lt.s32.totalorder %s14, 1
        %s229 = scalar_select %p228, %s14, 1
        %s230 = smul.addr %s229, 8
        %s231 = scalar_lea.vmem %s3, %s230
        %v232 = vld [vmem:[%s1] sm:$0xff]
        %v233 = vld [vmem:[%s1 + $0x8] sm:$0xff]
        %v234 = vld [vmem:[%s1 + $0x10] sm:$0xff]
        %v235 = vld [vmem:[%s1 + $0x18] sm:$0xff]
        %v236 = vld [vmem:[%s1 + $0x20] sm:$0xff]
        %v237 = vld [vmem:[%s1 + $0x28] sm:$0xff]
        %v238 = vld [vmem:[%s1 + $0x30] sm:$0xff]
        %v239 = vld [vmem:[%s1 + $0x38] sm:$0xff]
        %v240 = vld [vmem:[%s1 + $0x40] sm:$0x1]
        %v241 = vld [vmem:[%s208] sm:$0xff]
        %v242 = vld [vmem:[%s208 + $0x8] sm:$0xff]
        %v243 = vld [vmem:[%s208 + $0x10] sm:$0xff]
        %v244 = vld [vmem:[%s208 + $0x18] sm:$0xff]
        %v245 = vld [vmem:[%s208 + $0x20] sm:$0xff]
        %v246 = vld [vmem:[%s208 + $0x28] sm:$0xff]
        %v247 = vld [vmem:[%s208 + $0x30] sm:$0xff]
        %v248 = vld [vmem:[%s208 + $0x38] sm:$0xff]
        %v249 = vlaneseq
        %v250 = vshrl.u32 %v249, 7
        %v251 = vsub.s32 0, %v250
        %v252 = vrot.slane %v240, %v251
        %vm253 = vcmask 261120
        %v255 = vsel %vm253, %v241, 0
        %v258 = vsel %vm253, %v242, 0
        %v261 = vsel %vm253, %v243, 0
        %v264 = vsel %vm253, %v244, 0
        %v267 = vsel %vm253, %v245, 0
        %v270 = vsel %vm253, %v246, 0
        %v273 = vsel %vm253, %v247, 0
        %v276 = vsel %vm253, %v248, 0
        %278 = vmatprep.subr.mxu0 0.0
        %279 = vmatpush1.msra.mxu0 0.0
        %280 = vmatprep.subr.mxu0 0.0
        %281 = vmatpush1.msra.mxu0 0.0
        %282 = vmatprep.subr.mxu0 0.0
        %283 = vmatpush1.msra.mxu0 0.0
        %284 = vmatprep.subr.mxu0 0.0
        %285 = vmatpush1.msra.mxu0 0.0
        %286 = vmatprep.subr.mxu0 0.0
        %287 = vmatpush1.msra.mxu0 0.0
        %288 = vmatprep.subr.mxu0 0.0
        %289 = vmatpush1.msra.mxu0 0.0
        %290 = vmatprep.subr.mxu0 0.0
        %291 = vmatpush1.msra.mxu0 0.0
        %292 = vmatprep.subr.mxu0 0.0
        %293 = vmatpush1.msra.mxu0 0.0
        %294 = vmatprep.subr.mxu0 0.0
        %295 = vmatpush1.msra.mxu0 0.0
        %296 = vmatprep.subr.mxu0 0.0
        %297 = vmatpush1.msra.mxu0 0.0
        %298 = vmatprep.subr.mxu0 0.0
        %299 = vmatpush1.msra.mxu0 0.0
        %300 = vmatprep.subr.mxu0 0.0
        %301 = vmatpush1.msra.mxu0 0.0
        %302 = vmatprep.subr.mxu0 0.0
        %303 = vmatpush1.msra.mxu0 %v235
        %304 = vmatprep.subr.mxu0 0.0
        %305 = vmatpush1.msra.mxu0 %v234
        %306 = vmatprep.subr.mxu0 0.0
        %307 = vmatpush1.msra.mxu0 %v233
        %308 = vmatprep.subr.mxu0 0.0
        %309 = vmatpush1.msra.mxu0 %v232
        %310 = vmatprep.subr.mxu0 0.0
        %311 = vmatpush2.msra.mxu0 0.0
        %312 = vmatprep.subr.mxu0 0.0
        %313 = vmatpush2.msra.mxu0 0.0
        %314 = vmatprep.subr.mxu0 0.0
        %315 = vmatpush2.msra.mxu0 0.0
        %316 = vmatprep.subr.mxu0 0.0
        %317 = vmatpush2.msra.mxu0 0.0
        %318 = vmatprep.subr.mxu0 0.0
        %319 = vmatpush2.msra.mxu0 0.0
        %320 = vmatprep.subr.mxu0 0.0
        %321 = vmatpush2.msra.mxu0 0.0
        %322 = vmatprep.subr.mxu0 0.0
        %323 = vmatpush2.msra.mxu0 0.0
        %324 = vmatprep.subr.mxu0 0.0
        %325 = vmatpush2.msra.mxu0 0.0
        %326 = vmatprep.subr.mxu0 0.0
        %327 = vmatpush2.msra.mxu0 0.0
        %328 = vmatprep.subr.mxu0 0.0
        %329 = vmatpush2.msra.mxu0 0.0
        %330 = vmatprep.subr.mxu0 0.0
        %331 = vmatpush2.msra.mxu0 0.0
        %332 = vmatprep.subr.mxu0 0.0
        %333 = vmatpush2.msra.mxu0 0.0
        %334 = vmatprep.subr.mxu0 0.0
        %335 = vmatpush2.msra.mxu0 0.0
        %336 = vmatprep.subr.mxu0 0.0
        %337 = vmatpush2.msra.mxu0 0.0
        %338 = vmatprep.subr.mxu0 0.0
        %339 = vmatpush2.msra.mxu0 0.0
        %340 = vmatprep.subr.mxu0 0.0
        %341 = vmatpush2.msra.mxu0 0.0
        %342 = vmatprep.mubr.f32.mxu0 0.0
        %343 = vmatmul.mubr.f32.gmra.mxu0 %v255
        %v344 = vpop.f32.mrf.mxu0
        %v345 = vadd.f32 %v252, %v344
        %v346 = vpop.f32.mrf.mxu0
        %347 = vmatprep.mubr.f32.mxu0 0.0
        %348 = vmatmul.mubr.f32.gmra.mxu0 %v258
        %v349 = vpop.f32.mrf.mxu0
        %v350 = vadd.f32 %v252, %v349
        %v351 = vpop.f32.mrf.mxu0
        %352 = vmatprep.mubr.f32.mxu0 0.0
        %353 = vmatmul.mubr.f32.gmra.mxu0 %v261
        %v354 = vpop.f32.mrf.mxu0
        %v355 = vadd.f32 %v252, %v354
        %v356 = vpop.f32.mrf.mxu0
        %357 = vmatprep.mubr.f32.mxu0 0.0
        %358 = vmatmul.mubr.f32.gmra.mxu0 %v264
        %v359 = vpop.f32.mrf.mxu0
        %v360 = vadd.f32 %v252, %v359
        %v361 = vpop.f32.mrf.mxu0
        %362 = vmatprep.mubr.f32.mxu0 0.0
        %363 = vmatmul.mubr.f32.gmra.mxu0 %v267
        %v364 = vpop.f32.mrf.mxu0
        %v365 = vadd.f32 %v252, %v364
        %v366 = vpop.f32.mrf.mxu0
        %367 = vmatprep.mubr.f32.mxu0 0.0
        %368 = vmatmul.mubr.f32.gmra.mxu0 %v270
        %v369 = vpop.f32.mrf.mxu0
        %v370 = vadd.f32 %v252, %v369
        %v371 = vpop.f32.mrf.mxu0
        %372 = vmatprep.mubr.f32.mxu0 0.0
        %373 = vmatmul.mubr.f32.gmra.mxu0 %v273
        %v374 = vpop.f32.mrf.mxu0
        %v375 = vadd.f32 %v252, %v374
        %v376 = vpop.f32.mrf.mxu0
        %377 = vmatprep.mubr.f32.mxu0 0.0
        %378 = vmatmul.mubr.f32.gmra.mxu0 %v276
        %v379 = vpop.f32.mrf.mxu0
        %v380 = vadd.f32 %v252, %v379
        %v381 = vpop.f32.mrf.mxu0
        %382 = vdwg.mxu0
        %383 = vst.msk [vmem:[#allocation2] sm:$0xff] %vm253, %v345
        %384 = vst.msk [vmem:[#allocation2 + $0x8] sm:$0xff] %vm253, %v350
        %385 = vst.msk [vmem:[#allocation2 + $0x10] sm:$0xff] %vm253, %v355
        %386 = vst.msk [vmem:[#allocation2 + $0x18] sm:$0xff] %vm253, %v360
        %387 = vst.msk [vmem:[#allocation2 + $0x20] sm:$0xff] %vm253, %v365
        %388 = vst.msk [vmem:[#allocation2 + $0x28] sm:$0xff] %vm253, %v370
        %389 = vst.msk [vmem:[#allocation2 + $0x30] sm:$0xff] %vm253, %v375
        %390 = vst.msk [vmem:[#allocation2 + $0x38] sm:$0xff] %vm253, %v380
        %v391 = vld [vmem:[#allocation2] sm:$0xff]
        %v393 = vsel %vm253, 1.0, 0
        %395 = vmatprep.subr.mxu0 0.0
        %396 = vmatpush1.msra.mxu0 0.0
        %397 = vmatprep.subr.mxu0 0.0
        %398 = vmatpush1.msra.mxu0 0.0
        %399 = vmatprep.subr.mxu0 0.0
        %400 = vmatpush1.msra.mxu0 0.0
        %401 = vmatprep.subr.mxu0 0.0
        %402 = vmatpush1.msra.mxu0 0.0
        %403 = vmatprep.subr.mxu0 0.0
        %404 = vmatpush1.msra.mxu0 0.0
        %405 = vmatprep.subr.mxu0 0.0
        %406 = vmatpush1.msra.mxu0 0.0
        %407 = vmatprep.subr.mxu0 0.0
        %408 = vmatpush1.msra.mxu0 0.0
        %409 = vmatprep.subr.mxu0 0.0
        %410 = vmatpush1.msra.mxu0 0.0
        %411 = vmatprep.subr.mxu0 0.0
        %412 = vmatpush1.msra.mxu0 0.0
        %413 = vmatprep.subr.mxu0 0.0
        %414 = vmatpush1.msra.mxu0 0.0
        %415 = vmatprep.subr.mxu0 0.0
        %416 = vmatpush1.msra.mxu0 0.0
        %417 = vmatprep.subr.mxu0 0.0
        %418 = vmatpush1.msra.mxu0 0.0
        %419 = vmatprep.subr.mxu0 0.0
        %420 = vmatpush1.msra.mxu0 %v239
        %421 = vmatprep.subr.mxu0 0.0
        %422 = vmatpush1.msra.mxu0 %v238
        %423 = vmatprep.subr.mxu0 0.0
        %424 = vmatpush1.msra.mxu0 %v237
        %425 = vmatprep.subr.mxu0 0.0
        %426 = vmatpush1.msra.mxu0 %v236
        %427 = vmatprep.subr.mxu0 0.0
        %428 = vmatpush2.msra.mxu0 0.0
        %429 = vmatprep.subr.mxu0 0.0
        %430 = vmatpush2.msra.mxu0 0.0
        %431 = vmatprep.subr.mxu0 0.0
        %432 = vmatpush2.msra.mxu0 0.0
        %433 = vmatprep.subr.mxu0 0.0
        %434 = vmatpush2.msra.mxu0 0.0
        %435 = vmatprep.subr.mxu0 0.0
        %436 = vmatpush2.msra.mxu0 0.0
        %437 = vmatprep.subr.mxu0 0.0
        %438 = vmatpush2.msra.mxu0 0.0
        %439 = vmatprep.subr.mxu0 0.0
        %440 = vmatpush2.msra.mxu0 0.0
        %441 = vmatprep.subr.mxu0 0.0
        %442 = vmatpush2.msra.mxu0 0.0
        %443 = vmatprep.subr.mxu0 0.0
        %444 = vmatpush2.msra.mxu0 0.0
        %445 = vmatprep.subr.mxu0 0.0
        %446 = vmatpush2.msra.mxu0 0.0
        %447 = vmatprep.subr.mxu0 0.0
        %448 = vmatpush2.msra.mxu0 0.0
        %449 = vmatprep.subr.mxu0 0.0
        %450 = vmatpush2.msra.mxu0 0.0
        %451 = vmatprep.subr.mxu0 0.0
        %452 = vmatpush2.msra.mxu0 0.0
        %453 = vmatprep.subr.mxu0 0.0
        %454 = vmatpush2.msra.mxu0 0.0
        %455 = vmatprep.subr.mxu0 0.0
        %456 = vmatpush2.msra.mxu0 0.0
        %457 = vmatprep.subr.mxu0 0.0
        %458 = vmatpush2.msra.mxu0 0.0
        %459 = vmatprep.mubr.f32.mxu0 0.0
        %460 = vmatmul.mubr.f32.gmra.mxu0 %v393
        %v461 = vpop.f32.mrf.mxu0
        %v462 = vadd.f32 0.0, %v461
        %v463 = vpop.f32.mrf.mxu0
        %464 = vdwg.mxu0
        %v465 = vadd.f32 %v391, %v462
        %v466 = vtanh.pop %v465
        %v467 = vld [vmem:[#allocation2 + $0x8] sm:$0xff]
        %v469 = vsel %vm253, %v466, 0
        %471 = vmatprep.subr.mxu0 0.0
        %472 = vmatpush1.msra.mxu0 0.0
        %473 = vmatprep.subr.mxu0 0.0
        %474 = vmatpush1.msra.mxu0 0.0
        %475 = vmatprep.subr.mxu0 0.0
        %476 = vmatpush1.msra.mxu0 0.0
        %477 = vmatprep.subr.mxu0 0.0
        %478 = vmatpush1.msra.mxu0 0.0
        %479 = vmatprep.subr.mxu0 0.0
        %480 = vmatpush1.msra.mxu0 0.0
        %481 = vmatprep.subr.mxu0 0.0
        %482 = vmatpush1.msra.mxu0 0.0
        %483 = vmatprep.subr.mxu0 0.0
        %484 = vmatpush1.msra.mxu0 0.0
        %485 = vmatprep.subr.mxu0 0.0
        %486 = vmatpush1.msra.mxu0 0.0
        %487 = vmatprep.subr.mxu0 0.0
        %488 = vmatpush1.msra.mxu0 0.0
        %489 = vmatprep.subr.mxu0 0.0
        %490 = vmatpush1.msra.mxu0 0.0
        %491 = vmatprep.subr.mxu0 0.0
        %492 = vmatpush1.msra.mxu0 0.0
        %493 = vmatprep.subr.mxu0 0.0
        %494 = vmatpush1.msra.mxu0 0.0
        %495 = vmatprep.subr.mxu0 0.0
        %496 = vmatpush1.msra.mxu0 %v239
        %497 = vmatprep.subr.mxu0 0.0
        %498 = vmatpush1.msra.mxu0 %v238
        %499 = vmatprep.subr.mxu0 0.0
        %500 = vmatpush1.msra.mxu0 %v237
        %501 = vmatprep.subr.mxu0 0.0
        %502 = vmatpush1.msra.mxu0 %v236
        %503 = vmatprep.subr.mxu0 0.0
        %504 = vmatpush2.msra.mxu0 0.0
        %505 = vmatprep.subr.mxu0 0.0
        %506 = vmatpush2.msra.mxu0 0.0
        %507 = vmatprep.subr.mxu0 0.0
        %508 = vmatpush2.msra.mxu0 0.0
        %509 = vmatprep.subr.mxu0 0.0
        %510 = vmatpush2.msra.mxu0 0.0
        %511 = vmatprep.subr.mxu0 0.0
        %512 = vmatpush2.msra.mxu0 0.0
        %513 = vmatprep.subr.mxu0 0.0
        %514 = vmatpush2.msra.mxu0 0.0
        %515 = vmatprep.subr.mxu0 0.0
        %516 = vmatpush2.msra.mxu0 0.0
        %517 = vmatprep.subr.mxu0 0.0
        %518 = vmatpush2.msra.mxu0 0.0
        %519 = vmatprep.subr.mxu0 0.0
        %520 = vmatpush2.msra.mxu0 0.0
        %521 = vmatprep.subr.mxu0 0.0
        %522 = vmatpush2.msra.mxu0 0.0
        %523 = vmatprep.subr.mxu0 0.0
        %524 = vmatpush2.msra.mxu0 0.0
        %525 = vmatprep.subr.mxu0 0.0
        %526 = vmatpush2.msra.mxu0 0.0
        %527 = vmatprep.subr.mxu0 0.0
        %528 = vmatpush2.msra.mxu0 0.0
        %529 = vmatprep.subr.mxu0 0.0
        %530 = vmatpush2.msra.mxu0 0.0
        %531 = vmatprep.subr.mxu0 0.0
        %532 = vmatpush2.msra.mxu0 0.0
        %533 = vmatprep.subr.mxu0 0.0
        %534 = vmatpush2.msra.mxu0 0.0
        %535 = vmatprep.mubr.f32.mxu0 0.0
        %536 = vmatmul.mubr.f32.gmra.mxu0 %v469
        %v537 = vpop.f32.mrf.mxu0
        %v538 = vadd.f32 0.0, %v537
        %v539 = vpop.f32.mrf.mxu0
        %540 = vdwg.mxu0
        %v541 = vadd.f32 %v467, %v538
        %v542 = vtanh.pop %v541
        %v543 = vld [vmem:[#allocation2 + $0x10] sm:$0xff]
        %v545 = vsel %vm253, %v542, 0
        %547 = vmatprep.subr.mxu0 0.0
        %548 = vmatpush1.msra.mxu0 0.0
        %549 = vmatprep.subr.mxu0 0.0
        %550 = vmatpush1.msra.mxu0 0.0
        %551 = vmatprep.subr.mxu0 0.0
        %552 = vmatpush1.msra.mxu0 0.0
        %553 = vmatprep.subr.mxu0 0.0
        %554 = vmatpush1.msra.mxu0 0.0
        %555 = vmatprep.subr.mxu0 0.0
        %556 = vmatpush1.msra.mxu0 0.0
        %557 = vmatprep.subr.mxu0 0.0
        %558 = vmatpush1.msra.mxu0 0.0
        %559 = vmatprep.subr.mxu0 0.0
        %560 = vmatpush1.msra.mxu0 0.0
        %561 = vmatprep.subr.mxu0 0.0
        %562 = vmatpush1.msra.mxu0 0.0
        %563 = vmatprep.subr.mxu0 0.0
        %564 = vmatpush1.msra.mxu0 0.0
        %565 = vmatprep.subr.mxu0 0.0
        %566 = vmatpush1.msra.mxu0 0.0
        %567 = vmatprep.subr.mxu0 0.0
        %568 = vmatpush1.msra.mxu0 0.0
        %569 = vmatprep.subr.mxu0 0.0
        %570 = vmatpush1.msra.mxu0 0.0
        %571 = vmatprep.subr.mxu0 0.0
        %572 = vmatpush1.msra.mxu0 %v239
        %573 = vmatprep.subr.mxu0 0.0
        %574 = vmatpush1.msra.mxu0 %v238
        %575 = vmatprep.subr.mxu0 0.0
        %576 = vmatpush1.msra.mxu0 %v237
        %577 = vmatprep.subr.mxu0 0.0
        %578 = vmatpush1.msra.mxu0 %v236
        %579 = vmatprep.subr.mxu0 0.0
        %580 = vmatpush2.msra.mxu0 0.0
        %581 = vmatprep.subr.mxu0 0.0
        %582 = vmatpush2.msra.mxu0 0.0
        %583 = vmatprep.subr.mxu0 0.0
        %584 = vmatpush2.msra.mxu0 0.0
        %585 = vmatprep.subr.mxu0 0.0
        %586 = vmatpush2.msra.mxu0 0.0
        %587 = vmatprep.subr.mxu0 0.0
        %588 = vmatpush2.msra.mxu0 0.0
        %589 = vmatprep.subr.mxu0 0.0
        %590 = vmatpush2.msra.mxu0 0.0
        %591 = vmatprep.subr.mxu0 0.0
        %592 = vmatpush2.msra.mxu0 0.0
        %593 = vmatprep.subr.mxu0 0.0
        %594 = vmatpush2.msra.mxu0 0.0
        %595 = vmatprep.subr.mxu0 0.0
        %596 = vmatpush2.msra.mxu0 0.0
        %597 = vmatprep.subr.mxu0 0.0
        %598 = vmatpush2.msra.mxu0 0.0
        %599 = vmatprep.subr.mxu0 0.0
        %600 = vmatpush2.msra.mxu0 0.0
        %601 = vmatprep.subr.mxu0 0.0
        %602 = vmatpush2.msra.mxu0 0.0
        %603 = vmatprep.subr.mxu0 0.0
        %604 = vmatpush2.msra.mxu0 0.0
        %605 = vmatprep.subr.mxu0 0.0
        %606 = vmatpush2.msra.mxu0 0.0
        %607 = vmatprep.subr.mxu0 0.0
        %608 = vmatpush2.msra.mxu0 0.0
        %609 = vmatprep.subr.mxu0 0.0
        %610 = vmatpush2.msra.mxu0 0.0
        %611 = vmatprep.mubr.f32.mxu0 0.0
        %612 = vmatmul.mubr.f32.gmra.mxu0 %v545
        %v613 = vpop.f32.mrf.mxu0
        %v614 = vadd.f32 0.0, %v613
        %v615 = vpop.f32.mrf.mxu0
        %616 = vdwg.mxu0
        %v617 = vadd.f32 %v543, %v614
        %v618 = vtanh.pop %v617
        %v619 = vld [vmem:[#allocation2 + $0x18] sm:$0xff]
        %v621 = vsel %vm253, %v618, 0
        %623 = vmatprep.subr.mxu0 0.0
        %624 = vmatpush1.msra.mxu0 0.0
        %625 = vmatprep.subr.mxu0 0.0
        %626 = vmatpush1.msra.mxu0 0.0
        %627 = vmatprep.subr.mxu0 0.0
        %628 = vmatpush1.msra.mxu0 0.0
        %629 = vmatprep.subr.mxu0 0.0
        %630 = vmatpush1.msra.mxu0 0.0
        %631 = vmatprep.subr.mxu0 0.0
        %632 = vmatpush1.msra.mxu0 0.0
        %633 = vmatprep.subr.mxu0 0.0
        %634 = vmatpush1.msra.mxu0 0.0
        %635 = vmatprep.subr.mxu0 0.0
        %636 = vmatpush1.msra.mxu0 0.0
        %637 = vmatprep.subr.mxu0 0.0
        %638 = vmatpush1.msra.mxu0 0.0
        %639 = vmatprep.subr.mxu0 0.0
        %640 = vmatpush1.msra.mxu0 0.0
        %641 = vmatprep.subr.mxu0 0.0
        %642 = vmatpush1.msra.mxu0 0.0
        %643 = vmatprep.subr.mxu0 0.0
        %644 = vmatpush1.msra.mxu0 0.0
        %645 = vmatprep.subr.mxu0 0.0
        %646 = vmatpush1.msra.mxu0 0.0
        %647 = vmatprep.subr.mxu0 0.0
        %648 = vmatpush1.msra.mxu0 %v239
        %649 = vmatprep.subr.mxu0 0.0
        %650 = vmatpush1.msra.mxu0 %v238
        %651 = vmatprep.subr.mxu0 0.0
        %652 = vmatpush1.msra.mxu0 %v237
        %653 = vmatprep.subr.mxu0 0.0
        %654 = vmatpush1.msra.mxu0 %v236
        %655 = vmatprep.subr.mxu0 0.0
        %656 = vmatpush2.msra.mxu0 0.0
        %657 = vmatprep.subr.mxu0 0.0
        %658 = vmatpush2.msra.mxu0 0.0
        %659 = vmatprep.subr.mxu0 0.0
        %660 = vmatpush2.msra.mxu0 0.0
        %661 = vmatprep.subr.mxu0 0.0
        %662 = vmatpush2.msra.mxu0 0.0
        %663 = vmatprep.subr.mxu0 0.0
        %664 = vmatpush2.msra.mxu0 0.0
        %665 = vmatprep.subr.mxu0 0.0
        %666 = vmatpush2.msra.mxu0 0.0
        %667 = vmatprep.subr.mxu0 0.0
        %668 = vmatpush2.msra.mxu0 0.0
        %669 = vmatprep.subr.mxu0 0.0
        %670 = vmatpush2.msra.mxu0 0.0
        %671 = vmatprep.subr.mxu0 0.0
        %672 = vmatpush2.msra.mxu0 0.0
        %673 = vmatprep.subr.mxu0 0.0
        %674 = vmatpush2.msra.mxu0 0.0
        %675 = vmatprep.subr.mxu0 0.0
        %676 = vmatpush2.msra.mxu0 0.0
        %677 = vmatprep.subr.mxu0 0.0
        %678 = vmatpush2.msra.mxu0 0.0
        %679 = vmatprep.subr.mxu0 0.0
        %680 = vmatpush2.msra.mxu0 0.0
        %681 = vmatprep.subr.mxu0 0.0
        %682 = vmatpush2.msra.mxu0 0.0
        %683 = vmatprep.subr.mxu0 0.0
        %684 = vmatpush2.msra.mxu0 0.0
        %685 = vmatprep.subr.mxu0 0.0
        %686 = vmatpush2.msra.mxu0 0.0
        %687 = vmatprep.mubr.f32.mxu0 0.0
        %688 = vmatmul.mubr.f32.gmra.mxu0 %v621
        %v689 = vpop.f32.mrf.mxu0
        %v690 = vadd.f32 0.0, %v689
        %v691 = vpop.f32.mrf.mxu0
        %692 = vdwg.mxu0
        %v693 = vadd.f32 %v619, %v690
        %v694 = vtanh.pop %v693
        %v695 = vld [vmem:[#allocation2 + $0x20] sm:$0xff]
        %v697 = vsel %vm253, %v694, 0
        %699 = vmatprep.subr.mxu0 0.0
        %700 = vmatpush1.msra.mxu0 0.0
        %701 = vmatprep.subr.mxu0 0.0
        %702 = vmatpush1.msra.mxu0 0.0
        %703 = vmatprep.subr.mxu0 0.0
        %704 = vmatpush1.msra.mxu0 0.0
        %705 = vmatprep.subr.mxu0 0.0
        %706 = vmatpush1.msra.mxu0 0.0
        %707 = vmatprep.subr.mxu0 0.0
        %708 = vmatpush1.msra.mxu0 0.0
        %709 = vmatprep.subr.mxu0 0.0
        %710 = vmatpush1.msra.mxu0 0.0
        %711 = vmatprep.subr.mxu0 0.0
        %712 = vmatpush1.msra.mxu0 0.0
        %713 = vmatprep.subr.mxu0 0.0
        %714 = vmatpush1.msra.mxu0 0.0
        %715 = vmatprep.subr.mxu0 0.0
        %716 = vmatpush1.msra.mxu0 0.0
        %717 = vmatprep.subr.mxu0 0.0
        %718 = vmatpush1.msra.mxu0 0.0
        %719 = vmatprep.subr.mxu0 0.0
        %720 = vmatpush1.msra.mxu0 0.0
        %721 = vmatprep.subr.mxu0 0.0
        %722 = vmatpush1.msra.mxu0 0.0
        %723 = vmatprep.subr.mxu0 0.0
        %724 = vmatpush1.msra.mxu0 %v239
        %725 = vmatprep.subr.mxu0 0.0
        %726 = vmatpush1.msra.mxu0 %v238
        %727 = vmatprep.subr.mxu0 0.0
        %728 = vmatpush1.msra.mxu0 %v237
        %729 = vmatprep.subr.mxu0 0.0
        %730 = vmatpush1.msra.mxu0 %v236
        %731 = vmatprep.subr.mxu0 0.0
        %732 = vmatpush2.msra.mxu0 0.0
        %733 = vmatprep.subr.mxu0 0.0
        %734 = vmatpush2.msra.mxu0 0.0
        %735 = vmatprep.subr.mxu0 0.0
        %736 = vmatpush2.msra.mxu0 0.0
        %737 = vmatprep.subr.mxu0 0.0
        %738 = vmatpush2.msra.mxu0 0.0
        %739 = vmatprep.subr.mxu0 0.0
        %740 = vmatpush2.msra.mxu0 0.0
        %741 = vmatprep.subr.mxu0 0.0
        %742 = vmatpush2.msra.mxu0 0.0
        %743 = vmatprep.subr.mxu0 0.0
        %744 = vmatpush2.msra.mxu0 0.0
        %745 = vmatprep.subr.mxu0 0.0
        %746 = vmatpush2.msra.mxu0 0.0
        %747 = vmatprep.subr.mxu0 0.0
        %748 = vmatpush2.msra.mxu0 0.0
        %749 = vmatprep.subr.mxu0 0.0
        %750 = vmatpush2.msra.mxu0 0.0
        %751 = vmatprep.subr.mxu0 0.0
        %752 = vmatpush2.msra.mxu0 0.0
        %753 = vmatprep.subr.mxu0 0.0
        %754 = vmatpush2.msra.mxu0 0.0
        %755 = vmatprep.subr.mxu0 0.0
        %756 = vmatpush2.msra.mxu0 0.0
        %757 = vmatprep.subr.mxu0 0.0
        %758 = vmatpush2.msra.mxu0 0.0
        %759 = vmatprep.subr.mxu0 0.0
        %760 = vmatpush2.msra.mxu0 0.0
        %761 = vmatprep.subr.mxu0 0.0
        %762 = vmatpush2.msra.mxu0 0.0
        %763 = vmatprep.mubr.f32.mxu0 0.0
        %764 = vmatmul.mubr.f32.gmra.mxu0 %v697
        %v765 = vpop.f32.mrf.mxu0
        %v766 = vadd.f32 0.0, %v765
        %v767 = vpop.f32.mrf.mxu0
        %768 = vdwg.mxu0
        %v769 = vadd.f32 %v695, %v766
        %v770 = vtanh.pop %v769
        %v771 = vld [vmem:[#allocation2 + $0x28] sm:$0xff]
        %v773 = vsel %vm253, %v770, 0
        %775 = vmatprep.subr.mxu0 0.0
        %776 = vmatpush1.msra.mxu0 0.0
        %777 = vmatprep.subr.mxu0 0.0
        %778 = vmatpush1.msra.mxu0 0.0
        %779 = vmatprep.subr.mxu0 0.0
        %780 = vmatpush1.msra.mxu0 0.0
        %781 = vmatprep.subr.mxu0 0.0
        %782 = vmatpush1.msra.mxu0 0.0
        %783 = vmatprep.subr.mxu0 0.0
        %784 = vmatpush1.msra.mxu0 0.0
        %785 = vmatprep.subr.mxu0 0.0
        %786 = vmatpush1.msra.mxu0 0.0
        %787 = vmatprep.subr.mxu0 0.0
        %788 = vmatpush1.msra.mxu0 0.0
        %789 = vmatprep.subr.mxu0 0.0
        %790 = vmatpush1.msra.mxu0 0.0
        %791 = vmatprep.subr.mxu0 0.0
        %792 = vmatpush1.msra.mxu0 0.0
        %793 = vmatprep.subr.mxu0 0.0
        %794 = vmatpush1.msra.mxu0 0.0
        %795 = vmatprep.subr.mxu0 0.0
        %796 = vmatpush1.msra.mxu0 0.0
        %797 = vmatprep.subr.mxu0 0.0
        %798 = vmatpush1.msra.mxu0 0.0
        %799 = vmatprep.subr.mxu0 0.0
        %800 = vmatpush1.msra.mxu0 %v239
        %801 = vmatprep.subr.mxu0 0.0
        %802 = vmatpush1.msra.mxu0 %v238
        %803 = vmatprep.subr.mxu0 0.0
        %804 = vmatpush1.msra.mxu0 %v237
        %805 = vmatprep.subr.mxu0 0.0
        %806 = vmatpush1.msra.mxu0 %v236
        %807 = vmatprep.subr.mxu0 0.0
        %808 = vmatpush2.msra.mxu0 0.0
        %809 = vmatprep.subr.mxu0 0.0
        %810 = vmatpush2.msra.mxu0 0.0
        %811 = vmatprep.subr.mxu0 0.0
        %812 = vmatpush2.msra.mxu0 0.0
        %813 = vmatprep.subr.mxu0 0.0
        %814 = vmatpush2.msra.mxu0 0.0
        %815 = vmatprep.subr.mxu0 0.0
        %816 = vmatpush2.msra.mxu0 0.0
        %817 = vmatprep.subr.mxu0 0.0
        %818 = vmatpush2.msra.mxu0 0.0
        %819 = vmatprep.subr.mxu0 0.0
        %820 = vmatpush2.msra.mxu0 0.0
        %821 = vmatprep.subr.mxu0 0.0
        %822 = vmatpush2.msra.mxu0 0.0
        %823 = vmatprep.subr.mxu0 0.0
        %824 = vmatpush2.msra.mxu0 0.0
        %825 = vmatprep.subr.mxu0 0.0
        %826 = vmatpush2.msra.mxu0 0.0
        %827 = vmatprep.subr.mxu0 0.0
        %828 = vmatpush2.msra.mxu0 0.0
        %829 = vmatprep.subr.mxu0 0.0
        %830 = vmatpush2.msra.mxu0 0.0
        %831 = vmatprep.subr.mxu0 0.0
        %832 = vmatpush2.msra.mxu0 0.0
        %833 = vmatprep.subr.mxu0 0.0
        %834 = vmatpush2.msra.mxu0 0.0
        %835 = vmatprep.subr.mxu0 0.0
        %836 = vmatpush2.msra.mxu0 0.0
        %837 = vmatprep.subr.mxu0 0.0
        %838 = vmatpush2.msra.mxu0 0.0
        %839 = vmatprep.mubr.f32.mxu0 0.0
        %840 = vmatmul.mubr.f32.gmra.mxu0 %v773
        %v841 = vpop.f32.mrf.mxu0
        %v842 = vadd.f32 0.0, %v841
        %v843 = vpop.f32.mrf.mxu0
        %844 = vdwg.mxu0
        %v845 = vadd.f32 %v771, %v842
        %v846 = vtanh.pop %v845
        %v847 = vld [vmem:[#allocation2 + $0x30] sm:$0xff]
        %v849 = vsel %vm253, %v846, 0
        %851 = vmatprep.subr.mxu0 0.0
        %852 = vmatpush1.msra.mxu0 0.0
        %853 = vmatprep.subr.mxu0 0.0
        %854 = vmatpush1.msra.mxu0 0.0
        %855 = vmatprep.subr.mxu0 0.0
        %856 = vmatpush1.msra.mxu0 0.0
        %857 = vmatprep.subr.mxu0 0.0
        %858 = vmatpush1.msra.mxu0 0.0
        %859 = vmatprep.subr.mxu0 0.0
        %860 = vmatpush1.msra.mxu0 0.0
        %861 = vmatprep.subr.mxu0 0.0
        %862 = vmatpush1.msra.mxu0 0.0
        %863 = vmatprep.subr.mxu0 0.0
        %864 = vmatpush1.msra.mxu0 0.0
        %865 = vmatprep.subr.mxu0 0.0
        %866 = vmatpush1.msra.mxu0 0.0
        %867 = vmatprep.subr.mxu0 0.0
        %868 = vmatpush1.msra.mxu0 0.0
        %869 = vmatprep.subr.mxu0 0.0
        %870 = vmatpush1.msra.mxu0 0.0
        %871 = vmatprep.subr.mxu0 0.0
        %872 = vmatpush1.msra.mxu0 0.0
        %873 = vmatprep.subr.mxu0 0.0
        %874 = vmatpush1.msra.mxu0 0.0
        %875 = vmatprep.subr.mxu0 0.0
        %876 = vmatpush1.msra.mxu0 %v239
        %877 = vmatprep.subr.mxu0 0.0
        %878 = vmatpush1.msra.mxu0 %v238
        %879 = vmatprep.subr.mxu0 0.0
        %880 = vmatpush1.msra.mxu0 %v237
        %881 = vmatprep.subr.mxu0 0.0
        %882 = vmatpush1.msra.mxu0 %v236
        %883 = vmatprep.subr.mxu0 0.0
        %884 = vmatpush2.msra.mxu0 0.0
        %885 = vmatprep.subr.mxu0 0.0
        %886 = vmatpush2.msra.mxu0 0.0
        %887 = vmatprep.subr.mxu0 0.0
        %888 = vmatpush2.msra.mxu0 0.0
        %889 = vmatprep.subr.mxu0 0.0
        %890 = vmatpush2.msra.mxu0 0.0
        %891 = vmatprep.subr.mxu0 0.0
        %892 = vmatpush2.msra.mxu0 0.0
        %893 = vmatprep.subr.mxu0 0.0
        %894 = vmatpush2.msra.mxu0 0.0
        %895 = vmatprep.subr.mxu0 0.0
        %896 = vmatpush2.msra.mxu0 0.0
        %897 = vmatprep.subr.mxu0 0.0
        %898 = vmatpush2.msra.mxu0 0.0
        %899 = vmatprep.subr.mxu0 0.0
        %900 = vmatpush2.msra.mxu0 0.0
        %901 = vmatprep.subr.mxu0 0.0
        %902 = vmatpush2.msra.mxu0 0.0
        %903 = vmatprep.subr.mxu0 0.0
        %904 = vmatpush2.msra.mxu0 0.0
        %905 = vmatprep.subr.mxu0 0.0
        %906 = vmatpush2.msra.mxu0 0.0
        %907 = vmatprep.subr.mxu0 0.0
        %908 = vmatpush2.msra.mxu0 0.0
        %909 = vmatprep.subr.mxu0 0.0
        %910 = vmatpush2.msra.mxu0 0.0
        %911 = vmatprep.subr.mxu0 0.0
        %912 = vmatpush2.msra.mxu0 0.0
        %913 = vmatprep.subr.mxu0 0.0
        %914 = vmatpush2.msra.mxu0 0.0
        %915 = vmatprep.mubr.f32.mxu0 0.0
        %916 = vmatmul.mubr.f32.gmra.mxu0 %v849
        %v917 = vpop.f32.mrf.mxu0
        %v918 = vadd.f32 0.0, %v917
        %v919 = vpop.f32.mrf.mxu0
        %920 = vdwg.mxu0
        %v921 = vadd.f32 %v847, %v918
        %v922 = vtanh.pop %v921
        %v923 = vld [vmem:[#allocation2 + $0x38] sm:$0xff]
        %v925 = vsel %vm253, %v922, 0
        %927 = vmatprep.subr.mxu0 0.0
        %928 = vmatpush1.msra.mxu0 0.0
        %929 = vmatprep.subr.mxu0 0.0
        %930 = vmatpush1.msra.mxu0 0.0
        %931 = vmatprep.subr.mxu0 0.0
        %932 = vmatpush1.msra.mxu0 0.0
        %933 = vmatprep.subr.mxu0 0.0
        %934 = vmatpush1.msra.mxu0 0.0
        %935 = vmatprep.subr.mxu0 0.0
        %936 = vmatpush1.msra.mxu0 0.0
        %937 = vmatprep.subr.mxu0 0.0
        %938 = vmatpush1.msra.mxu0 0.0
        %939 = vmatprep.subr.mxu0 0.0
        %940 = vmatpush1.msra.mxu0 0.0
        %941 = vmatprep.subr.mxu0 0.0
        %942 = vmatpush1.msra.mxu0 0.0
        %943 = vmatprep.subr.mxu0 0.0
        %944 = vmatpush1.msra.mxu0 0.0
        %945 = vmatprep.subr.mxu0 0.0
        %946 = vmatpush1.msra.mxu0 0.0
        %947 = vmatprep.subr.mxu0 0.0
        %948 = vmatpush1.msra.mxu0 0.0
        %949 = vmatprep.subr.mxu0 0.0
        %950 = vmatpush1.msra.mxu0 0.0
        %951 = vmatprep.subr.mxu0 0.0
        %952 = vmatpush1.msra.mxu0 %v239
        %953 = vmatprep.subr.mxu0 0.0
        %954 = vmatpush1.msra.mxu0 %v238
        %955 = vmatprep.subr.mxu0 0.0
        %956 = vmatpush1.msra.mxu0 %v237
        %957 = vmatprep.subr.mxu0 0.0
        %958 = vmatpush1.msra.mxu0 %v236
        %959 = vmatprep.subr.mxu0 0.0
        %960 = vmatpush2.msra.mxu0 0.0
        %961 = vmatprep.subr.mxu0 0.0
        %962 = vmatpush2.msra.mxu0 0.0
        %963 = vmatprep.subr.mxu0 0.0
        %964 = vmatpush2.msra.mxu0 0.0
        %965 = vmatprep.subr.mxu0 0.0
        %966 = vmatpush2.msra.mxu0 0.0
        %967 = vmatprep.subr.mxu0 0.0
        %968 = vmatpush2.msra.mxu0 0.0
        %969 = vmatprep.subr.mxu0 0.0
        %970 = vmatpush2.msra.mxu0 0.0
        %971 = vmatprep.subr.mxu0 0.0
        %972 = vmatpush2.msra.mxu0 0.0
        %973 = vmatprep.subr.mxu0 0.0
        %974 = vmatpush2.msra.mxu0 0.0
        %975 = vmatprep.subr.mxu0 0.0
        %976 = vmatpush2.msra.mxu0 0.0
        %977 = vmatprep.subr.mxu0 0.0
        %978 = vmatpush2.msra.mxu0 0.0
        %979 = vmatprep.subr.mxu0 0.0
        %980 = vmatpush2.msra.mxu0 0.0
        %981 = vmatprep.subr.mxu0 0.0
        %982 = vmatpush2.msra.mxu0 0.0
        %983 = vmatprep.subr.mxu0 0.0
        %984 = vmatpush2.msra.mxu0 0.0
        %985 = vmatprep.subr.mxu0 0.0
        %986 = vmatpush2.msra.mxu0 0.0
        %987 = vmatprep.subr.mxu0 0.0
        %988 = vmatpush2.msra.mxu0 0.0
        %989 = vmatprep.subr.mxu0 0.0
        %990 = vmatpush2.msra.mxu0 0.0
        %991 = vmatprep.mubr.f32.mxu0 0.0
        %992 = vmatmul.mubr.f32.gmra.mxu0 %v925
        %v993 = vpop.f32.mrf.mxu0
        %v994 = vadd.f32 0.0, %v993
        %v995 = vpop.f32.mrf.mxu0
        %996 = vdwg.mxu0
        %v997 = vadd.f32 %v923, %v994
        %v998 = vtanh.pop %v997
        %v999 = vld [vmem:[%s2] sm:$0xff]
        %v1000 = vld [vmem:[%s2 + $0x8] sm:$0xff]
        %v1001 = vld [vmem:[%s2 + $0x10] sm:$0xff]
        %v1002 = vld [vmem:[%s2 + $0x18] sm:$0xff]
        %v1003 = vld [vmem:[%s2 + $0x20] sm:$0x1]
        %v1004 = vlaneseq
        %v1005 = vshrl.u32 %v1004, 7
        %v1006 = vsub.s32 0, %v1005
        %v1007 = vrot.slane %v1003, %v1006
        %v1009 = vsel %vm253, %v998, 0
        %1011 = vmatprep.subr.mxu0 0.0
        %1012 = vmatpush1.msra.mxu0 0.0
        %1013 = vmatprep.subr.mxu0 0.0
        %1014 = vmatpush1.msra.mxu0 0.0
        %1015 = vmatprep.subr.mxu0 0.0
        %1016 = vmatpush1.msra.mxu0 0.0
        %1017 = vmatprep.subr.mxu0 0.0
        %1018 = vmatpush1.msra.mxu0 0.0
        %1019 = vmatprep.subr.mxu0 0.0
        %1020 = vmatpush1.msra.mxu0 0.0
        %1021 = vmatprep.subr.mxu0 0.0
        %1022 = vmatpush1.msra.mxu0 0.0
        %1023 = vmatprep.subr.mxu0 0.0
        %1024 = vmatpush1.msra.mxu0 0.0
        %1025 = vmatprep.subr.mxu0 0.0
        %1026 = vmatpush1.msra.mxu0 0.0
        %1027 = vmatprep.subr.mxu0 0.0
        %1028 = vmatpush1.msra.mxu0 0.0
        %1029 = vmatprep.subr.mxu0 0.0
        %1030 = vmatpush1.msra.mxu0 0.0
        %1031 = vmatprep.subr.mxu0 0.0
        %1032 = vmatpush1.msra.mxu0 0.0
        %1033 = vmatprep.subr.mxu0 0.0
        %1034 = vmatpush1.msra.mxu0 0.0
        %1035 = vmatprep.subr.mxu0 0.0
        %1036 = vmatpush1.msra.mxu0 %v1002
        %1037 = vmatprep.subr.mxu0 0.0
        %1038 = vmatpush1.msra.mxu0 %v1001
        %1039 = vmatprep.subr.mxu0 0.0
        %1040 = vmatpush1.msra.mxu0 %v1000
        %1041 = vmatprep.subr.mxu0 0.0
        %1042 = vmatpush1.msra.mxu0 %v999
        %1043 = vmatprep.subr.mxu0 0.0
        %1044 = vmatpush2.msra.mxu0 0.0
        %1045 = vmatprep.subr.mxu0 0.0
        %1046 = vmatpush2.msra.mxu0 0.0
        %1047 = vmatprep.subr.mxu0 0.0
        %1048 = vmatpush2.msra.mxu0 0.0
        %1049 = vmatprep.subr.mxu0 0.0
        %1050 = vmatpush2.msra.mxu0 0.0
        %1051 = vmatprep.subr.mxu0 0.0
        %1052 = vmatpush2.msra.mxu0 0.0
        %1053 = vmatprep.subr.mxu0 0.0
        %1054 = vmatpush2.msra.mxu0 0.0
        %1055 = vmatprep.subr.mxu0 0.0
        %1056 = vmatpush2.msra.mxu0 0.0
        %1057 = vmatprep.subr.mxu0 0.0
        %1058 = vmatpush2.msra.mxu0 0.0
        %1059 = vmatprep.subr.mxu0 0.0
        %1060 = vmatpush2.msra.mxu0 0.0
        %1061 = vmatprep.subr.mxu0 0.0
        %1062 = vmatpush2.msra.mxu0 0.0
        %1063 = vmatprep.subr.mxu0 0.0
        %1064 = vmatpush2.msra.mxu0 0.0
        %1065 = vmatprep.subr.mxu0 0.0
        %1066 = vmatpush2.msra.mxu0 0.0
        %1067 = vmatprep.subr.mxu0 0.0
        %1068 = vmatpush2.msra.mxu0 0.0
        %1069 = vmatprep.subr.mxu0 0.0
        %1070 = vmatpush2.msra.mxu0 0.0
        %1071 = vmatprep.subr.mxu0 0.0
        %1072 = vmatpush2.msra.mxu0 0.0
        %1073 = vmatprep.subr.mxu0 0.0
        %1074 = vmatpush2.msra.mxu0 0.0
        %1075 = vmatprep.mubr.f32.mxu0 0.0
        %1076 = vmatmul.mubr.f32.gmra.mxu0 %v1009
        %v1077 = vpop.f32.mrf.mxu0
        %v1078 = vadd.f32 %v1007, %v1077
        %v1079 = vpop.f32.mrf.mxu0
        %1080 = vdwg.mxu0
        %vm1081 = vcmask 64512
        %v1082 = vsel %vm1081, %v1078, -inf
        %1083 = vmax.xlane.f32.xlu0 %v1082
        %v1084 = vpop.xlane.xlu0 %1083
        %v1085 = vsub.f32 %v1078, %v1084
        %v1086 = vmul.f32 %v1085, 1.442695
        %v1087 = vpow.pop %v1086
        %v1088 = vsel %vm1081, %v1087, 0.0
        %1089 = vadd.xlane.f32.xlu0 %v1088
        %v1090 = vpop.xlane.xlu0 %1089
        %v1091 = vrcp.pop %v1090
        %v1092 = vmul.f32 %v1087, %v1091
        %1093 = vst.msk [vmem:[%s231] sm:$0xff] %vm1081, %v1092
        %p1094 = scmp.lt.s32.totalorder %s14, 1
        %s1095 = scalar_select %p1094, %s14, 1
        %s1096 = smul.addr %s1095, 8
        %s1097 = scalar_lea.vmem %s3, %s1096
        // Predicated region
        $region71: #{ptrnn_forward.1} parent=65 // pred_check
          %p1098 = pneg %p100
        $region72: #{ptrnn_forward.1} parent=65 // pred_check_branch
          %1100 = sbr.rel (%p1098) target = $region74
        $region73: #{ptrnn_forward.1} parent=65 // pred_region
          _
        $region74: #{ptrnn_forward.1} parent=65 // pred_fallthru
          _
      $region66: #{ptrnn_forward.1} parent=5 // pred_fallthru
        _
      %p1101 = scmp.le.s32.totalorder 2, %s9
      // Predicated region
      $region75: #{ptrnn_forward.1} parent=5 // pred_check
        %p1102 = pneg %p1101
      $region76: #{ptrnn_forward.1} parent=5 // pred_check_branch
        %1104 = sbr.rel (%p1102) target = $region78
      $region77: #{ptrnn_forward.1} parent=5 // pred_region
        %s1105 = ssub.s32 %s9, 2
        // Predicated region
        $region79: #{ptrnn_forward.1} parent=77 // pred_check
          %p1106 = pneg %p106
        $region80: #{ptrnn_forward.1} parent=77 // pred_check_branch
          %1108 = sbr.rel (%p1106) target = $region82
        $region81: #{ptrnn_forward.1} parent=77 // pred_region
          %p1109 = scmp.lt.s32.totalorder %s15, 1
          %s1110 = scalar_select %p1109, %s15, 1
          %s1111 = smul.addr %s1110, 8
          %s1112 = scalar_lea.vmem %s3, %s1111
        $region82: #{ptrnn_forward.1} parent=77 // pred_fallthru
          _
      $region78: #{ptrnn_forward.1} parent=5 // pred_fallthru
        _
    $region6: #{ptrnn_forward.1} parent=1 // loop_footer
      %s13 = sadd.s32 1, %s9
    $region7: #{ptrnn_forward.1} parent=1 // loop_footer_branch
      %8 = sbr.rel target = $region3
    $region8: #{ptrnn_forward.1} parent=1 // loop_exit
      _

</llo_original>
